<compile_context>
chip_gen: v7x
topology: tpu7x:2x2x1
jax: 0.10.0
libtpu: 0.0.40
codegen_flags: <defaults>
</compile_context>

<pallas_src>
import functools

import jax
import jax.numpy as jnp
from jax.experimental import pallas as pl
from jax.experimental.pallas import tpu as pltpu

_LANE = 128


def _round_up(v, m):
    return (v + m - 1) // m * m


# ---------------- phase (a): streaming global-sum pool over HW tiles ----------------
def _pool_sum_kernel(x_ref, o_ref, *, hw_total, hw_tile, ragged):
    # x_ref: (1, C_in, hw_tile)   one batch element, one spatial tile
    # o_ref: (1, C_in, 1)  f32    running sum, resident across the HW-tile axis
    t = pl.program_id(1)

    @pl.when(t == 0)
    def _():
        o_ref[...] = jnp.zeros_like(o_ref)

    x = x_ref[0].astype(jnp.float32)          # (C_in, hw_tile), f32 accumulation
    if ragged:
        # Mask lanes past the true HW extent on the (possibly) partial last tile.
        lane = jax.lax.broadcasted_iota(jnp.int32, x.shape, 1)
        valid = hw_total - t * hw_tile
        x = jnp.where(lane < valid, x, 0.0)

    o_ref[0] += jnp.sum(x, axis=1, keepdims=True)   # (C_in, 1)


# ---------------- phase (b): batched 1x1 conv + folded BN + ReLU --------------------
def _conv_bn_relu_kernel(p_ref, w_ref, shift_ref, y_ref):
    # p_ref:     (N, C_in)    pooled SUMS over HW
    # w_ref:     (C_in, C_out) conv weight^T with BN scale and 1/HW folded in
    # shift_ref: (1, C_out)   folded BN shift = beta - mean * scale
    # y_ref:     (N, C_out)
    y = jnp.dot(p_ref[...], w_ref[...], preferred_element_type=jnp.float32)
    y = jnp.maximum(y + shift_ref[...], 0.0)
    y_ref[...] = y.astype(y_ref.dtype)


# ---------------- phase (c): broadcast the 1x1 result over HW tiles -----------------
def _broadcast_kernel(y_ref, o_ref):
    # y_ref: (1, C_out, 1)
    # o_ref: (1, C_out, hw_tile)   lane-dense output tile
    c_out, hw_tile = o_ref.shape[1], o_ref.shape[2]
    o_ref[0] = jnp.broadcast_to(y_ref[0], (c_out, hw_tile)).astype(o_ref.dtype)


def aspp_pooling(x, conv_weight, gamma, beta, running_mean, running_var, eps=1e-5,
                 pool_lane_tile=512, bcast_lane_tile=1024):
    """x: (N, C_in, H, W). conv_weight: (C_out, C_in, 1, 1). Eval-mode BatchNorm."""
    N, C_in, H, W = x.shape
    C_out = conv_weight.shape[0]
    HW = H * W

    # Fold BN (running stats) scale and the 1/HW of the average pool into the weight.
    inv_std = 1.0 / jnp.sqrt(running_var.astype(jnp.float32) + eps)
    scale = gamma.astype(jnp.float32) * inv_std                                   # (C_out,)
    shift = beta.astype(jnp.float32) - running_mean.astype(jnp.float32) * scale   # (C_out,)
    w2 = conv_weight.reshape(C_out, C_in).astype(jnp.float32)
    w_folded = (w2 * scale[:, None] * (1.0 / HW)).T                               # (C_in, C_out)
    shift_row = shift.reshape(1, C_out)

    x_flat = x.reshape(N, C_in, HW)

    # ----- phase (a): pooled sums (N, C_in, 1) f32, HW tiled on the lane axis -----
    hw_tile_in = min(pool_lane_tile, _round_up(HW, _LANE))
    n_in_tiles = pl.cdiv(HW, hw_tile_in)
    ragged = (HW % hw_tile_in) != 0

    pooled = pl.pallas_call(
        functools.partial(_pool_sum_kernel,
                          hw_total=HW, hw_tile=hw_tile_in, ragged=ragged),
        out_shape=jax.ShapeDtypeStruct((N, C_in, 1), jnp.float32),
        grid_spec=pltpu.PrefetchScalarGridSpec(
            num_scalar_prefetch=0,
            grid=(N, n_in_tiles),
            in_specs=[pl.BlockSpec((1, C_in, hw_tile_in), lambda n, t: (n, 0, t))],
            out_specs=pl.BlockSpec((1, C_in, 1), lambda n, t: (n, 0, 0)),
        ),
        compiler_params=pltpu.CompilerParams(
            dimension_semantics=("parallel", "arbitrary")),
    )(x_flat)

    # ----- phase (b): tiny batched conv + BN + ReLU on (N, C_in) pooled sums -----
    p2 = pooled.reshape(N, C_in)
    y = pl.pallas_call(
        _conv_bn_relu_kernel,
        out_shape=jax.ShapeDtypeStruct((N, C_out), jnp.float32),
        grid_spec=pltpu.PrefetchScalarGridSpec(
            num_scalar_prefetch=0,
            grid=(1,),
            in_specs=[
                pl.BlockSpec((N, C_in), lambda i: (0, 0)),
                pl.BlockSpec((C_in, C_out), lambda i: (0, 0)),
                pl.BlockSpec((1, C_out), lambda i: (0, 0)),
            ],
            out_specs=pl.BlockSpec((N, C_out), lambda i: (0, 0)),
        ),
        compiler_params=pltpu.CompilerParams(dimension_semantics=("arbitrary",)),
    )(p2, w_folded, shift_row)

    # ----- phase (c): broadcast-write over lane-dense HW tiles -----
    y3 = y.reshape(N, C_out, 1)
    hw_tile_out = min(bcast_lane_tile, _round_up(HW, _LANE))
    n_out_tiles = pl.cdiv(HW, hw_tile_out)

    out_flat = pl.pallas_call(
        _broadcast_kernel,
        out_shape=jax.ShapeDtypeStruct((N, C_out, HW), x.dtype),
        grid_spec=pltpu.PrefetchScalarGridSpec(
            num_scalar_prefetch=0,
            grid=(N, n_out_tiles),
            in_specs=[pl.BlockSpec((1, C_out, 1), lambda n, t: (n, 0, 0))],
            out_specs=pl.BlockSpec((1, C_out, hw_tile_out), lambda n, t: (n, 0, t)),
        ),
        compiler_params=pltpu.CompilerParams(
            dimension_semantics=("parallel", "parallel")),
    )(y3)

    return out_flat.reshape(N, C_out, H, W)


def _reference(x, conv_weight, gamma, beta, running_mean, running_var, eps=1e-5):
    # Pure-JAX reference of the PyTorch forward (eval-mode BN).
    N, C_in, H, W = x.shape
    C_out = conv_weight.shape[0]
    pooled = jnp.mean(x, axis=(2, 3))                              # (N, C_in)
    y = pooled @ conv_weight.reshape(C_out, C_in).T                # (N, C_out)
    y = (y - running_mean) / jnp.sqrt(running_var + eps) * gamma + beta
    y = jnp.maximum(y, 0.0)
    return jnp.broadcast_to(y[:, :, None, None], (N, C_out, H, W))


if __name__ == "__main__":
    key = jax.random.PRNGKey(0)
    k_x, k_w, k_g, k_b, k_m, k_v = jax.random.split(key, 6)

    N, C_in, C_out, H, W = 2, 4, 8, 16, 16

    x = jax.random.normal(k_x, (N, C_in, H, W), dtype=jnp.float32)
    conv_weight = jax.random.normal(k_w, (C_out, C_in, 1, 1), dtype=jnp.float32) * 0.5
    gamma = 1.0 + 0.1 * jax.random.normal(k_g, (C_out,), dtype=jnp.float32)
    beta = 0.1 * jax.random.normal(k_b, (C_out,), dtype=jnp.float32)
    running_mean = 0.1 * jax.random.normal(k_m, (C_out,), dtype=jnp.float32)
    running_var = jnp.abs(jax.random.normal(k_v, (C_out,), dtype=jnp.float32)) + 0.5

    out = aspp_pooling(x, conv_weight, gamma, beta, running_mean, running_var)
    out = jax.block_until_ready(out)

    ref = _reference(x, conv_weight, gamma, beta, running_mean, running_var)
    assert out.shape == (N, C_out, H, W)
    assert jnp.allclose(out, ref, atol=1e-5, rtol=1e-5), "mismatch vs reference"

    print("KERNEL_OK")
</pallas_src>

<mosaic_0001>
module attributes {stable_mosaic.version = 11 : i64} {
  func.func @_pool_sum_kernel(%arg0: i32, %arg1: i32, %arg2: memref<1x4x256xf32, #tpu.memory_space<vmem>>, %arg3: memref<1x4x1xf32, #tpu.memory_space<vmem>>) attributes {dimension_semantics = [#tpu.dimension_semantics<parallel>, #tpu.dimension_semantics<arbitrary>], iteration_bounds = array<i64: 2, 1>, scalar_prefetch = 0 : i64, scratch_operands = 0 : i64, tpu.core_type = #tpu.core_type<tc>, window_params = [{transform_indices = @transform_0, window_bounds = array<i64: 1, 4, 256>}, {transform_indices = @transform_1, window_bounds = array<i64: 1, 4, 1>}]} {
    %c0_i32 = arith.constant 0 : i32
    %0 = arith.cmpi eq, %arg1, %c0_i32 : i32
    %1 = arith.extui %0 : i1 to i32
    %c0_i32_0 = arith.constant 0 : i32
    %2 = arith.cmpi ne, %1, %c0_i32_0 : i32
    scf.if %2 {
      %cst_9 = arith.constant 0.000000e+00 : f32
      %13 = vector.broadcast %cst_9 : f32 to vector<1x4x1xf32>
      %c0_10 = arith.constant 0 : index
      %c0_11 = arith.constant 0 : index
      %c0_12 = arith.constant 0 : index
      %14 = vector.load %arg3[%c0_10, %c0_11, %c0_12] : memref<1x4x1xf32, #tpu.memory_space<vmem>>, vector<1x4x1xf32>
      tpu.vector_store %arg3[%c0_10, %c0_11, %c0_12], %13 {strides = array<i32>} : memref<1x4x1xf32, #tpu.memory_space<vmem>>, vector<1x4x1xf32>,
    } else {
    }
    %c0 = arith.constant 0 : index
    %c0_1 = arith.constant 0 : index
    %c0_2 = arith.constant 0 : index
    %3 = vector.load %arg2[%c0, %c0_1, %c0_2] : memref<1x4x256xf32, #tpu.memory_space<vmem>>, vector<1x4x256xf32>
    %4 = vector.shape_cast %3 : vector<1x4x256xf32> to vector<4x256xf32>
    %c0_3 = arith.constant 0 : index
    %c0_4 = arith.constant 0 : index
    %c0_5 = arith.constant 0 : index
    %5 = vector.load %arg3[%c0_3, %c0_4, %c0_5] : memref<1x4x1xf32, #tpu.memory_space<vmem>>, vector<1x4x1xf32>
    %6 = vector.shape_cast %5 : vector<1x4x1xf32> to vector<4x1xf32>
    %cst = arith.constant dense<0.000000e+00> : vector<4xf32>
    %7 = vector.multi_reduction <add>, %4, %cst [1] : vector<4x256xf32> to vector<4xf32>
    %8 = vector.shape_cast %7 : vector<4xf32> to vector<4x1xf32>
    %9 = arith.addf %6, %8 : vector<4x1xf32>
    %c0_6 = arith.constant 0 : index
    %c0_7 = arith.constant 0 : index
    %c0_8 = arith.constant 0 : index
    %10 = vector.load %arg3[%c0_6, %c0_7, %c0_8] : memref<1x4x1xf32, #tpu.memory_space<vmem>>, vector<1x4x1xf32>
    %11 = vector.shape_cast %10 : vector<1x4x1xf32> to vector<4x1xf32>
    %12 = vector.shape_cast %9 : vector<4x1xf32> to vector<1x4x1xf32>
    tpu.vector_store %arg3[%c0_6, %c0_7, %c0_8], %12 {strides = array<i32>} : memref<1x4x1xf32, #tpu.memory_space<vmem>>, vector<1x4x1xf32>,
    return
  }
  func.func @transform_0(%arg0: i32, %arg1: i32) -> (i32, i32, i32) {
    %c0_i32 = arith.constant 0 : i32
    %c0_i32_0 = arith.constant 0 : i32
    return %arg0, %c0_i32, %arg1 : i32, i32, i32
  }
  func.func @transform_1(%arg0: i32, %arg1: i32) -> (i32, i32, i32) {
    %c0_i32 = arith.constant 0 : i32
    %c0_i32_0 = arith.constant 0 : i32
    %c0_i32_1 = arith.constant 0 : i32
    return %arg0, %c0_i32, %c0_i32_0 : i32, i32, i32
  }
}

</mosaic_0001>

<llo_original>
// kernel: tpu_custom_call.1
$region0: #{tpu_custom_call.1}
  #allocation0 [shape = 'u32[]', space=smem, size = 0x4, offset = 0x4, fixed_abs, tag = 'smem constant byte address 0x4 - core index']
  #allocation1 [shape = 'u32[144,128]{1,0:T(1,128)}', space=vmem, size = 0x12000, scoped, tag = 'internal scratch']
  %s0 = inlined_call_operand.hbm [shape: f32[2,4,256], index: 0, kind: input, shape index: {}]
  %s1 = inlined_call_operand.vmem [shape: f32[2,4,1], index: 1, kind: output, shape index: {}]
  %s2 = sld [smem:[#allocation0]]
  $region45: #{tpu_custom_call.1} parent=0
    _
  %s4 = ssub.s32 1, %s2
  %s5 = scalar_select 0, %s4, %s2
  $region1: #{tpu_custom_call.1} parent=0
    #allocation2 [shape = 'u8[8192]{0}', space=vmem, size = 0x2000, scoped, tag = 'input window, operand 0']
    #allocation3 [shape = 's32[2]{0}', space=sflag, size = 0x8, scoped, tag = 'scoped memory for tpu_custom_call.1']
    %6 = vsyncpa [#allocation3], 0
    %s7 = scalar_lea.sflag [#allocation3], 1
    %8 = vsyncpa %s7, 0
    loop: start=0, step=1, limit=4
    $region2: #{tpu_custom_call.1} parent=1 // loop_pre_header
      _
    $region3: #{tpu_custom_call.1} parent=1 // loop_header
      %s10 = sphi 0, %s14
      %p11 = scmp.ge.s32.totalorder %s10, 4
      %s17 = sphi 0, %s29
      %s18 = sphi 0, %s25
      %s19 = sphi 0, %s17
      %s20 = sphi 0, %s18
      %s21 = sphi 0, %s19
      %s22 = sphi 0, %s20
      %s34 = sphi 0, %s36
      %s37 = sphi 0, %s34
      %s38 = sphi 0, %s37
      %s54 = sphi 0, %s38
      %s60 = sphi 0, %s62
      %s63 = sphi 0, %s60
      %s64 = sphi 0, %s63
      %s80 = sphi 0, %s64
    $region4: #{tpu_custom_call.1} parent=1 // loop_header_branch
      %13 = sbr.rel (%p11) target = $region8
    $region5: #{tpu_custom_call.1} parent=1 // loop_body
      %s15 = ssub.s32 %s10, 1
      %s16 = ssub.s32 %s10, 2
      %s23 = sadd.s32 1, %s18
      %p24 = scmp.ge.s32.totalorder %s23, 1
      %s25 = scalar_select %p24, 0, %s23
      %s26 = sadd.s32 1, %s17
      %s27 = scalar_select %p24, %s26, %s17
      %p28 = scmp.ge.s32.totalorder %s27, 2
      %s29 = scalar_select %p28, 0, %s27
      %s30 = ssub.s32 %s17, %s29
      %s31 = ssub.s32 %s18, %s25
      %s32 = sor.u32 %s30, %s31
      %p33 = scmp.eq.s32.totalorder %s32, 0
      %s35 = sadd.s32 %s34, 1
      %s36 = scalar_select %p33, %s34, %s35
      %p39 = pneg %p33
      %p40 = scmp.eq.s32.totalorder %s10, 1
      %p41 = por %p39, %p40
      %p42 = scmp.ne.s32.totalorder %s34, %s37
      %p43 = scmp.eq.s32.totalorder %s10, 0
      %p44 = por %p42, %p43
      %p45 = scmp.ne.s32.totalorder %s34, %s37
      %p46 = scmp.eq.s32.totalorder %s15, 1
      %p47 = por %p45, %p46
      %p48 = scmp.ne.s32.totalorder %s37, %s38
      %p49 = scmp.eq.s32.totalorder %s15, 0
      %p50 = por %p48, %p49
      %p51 = scmp.ne.s32.totalorder %s37, %s38
      %p52 = scmp.eq.s32.totalorder %s16, 1
      %p53 = por %p51, %p52
      %p55 = scmp.ne.s32.totalorder %s38, %s54
      %p56 = scmp.eq.s32.totalorder %s16, 0
      %p57 = por %p55, %p56
      %s58 = ssub.s32 %s17, %s29
      %p59 = scmp.eq.s32.totalorder %s58, 0
      %s61 = sadd.s32 %s60, 1
      %s62 = scalar_select %p59, %s60, %s61
      %p65 = pneg %p59
      %p66 = scmp.eq.s32.totalorder %s10, 1
      %p67 = por %p65, %p66
      %p68 = scmp.ne.s32.totalorder %s60, %s63
      %p69 = scmp.eq.s32.totalorder %s10, 0
      %p70 = por %p68, %p69
      %p71 = scmp.ne.s32.totalorder %s60, %s63
      %p72 = scmp.eq.s32.totalorder %s15, 1
      %p73 = por %p71, %p72
      %p74 = scmp.ne.s32.totalorder %s63, %s64
      %p75 = scmp.eq.s32.totalorder %s15, 0
      %p76 = por %p74, %p75
      %p77 = scmp.ne.s32.totalorder %s63, %s64
      %p78 = scmp.eq.s32.totalorder %s16, 1
      %p79 = por %p77, %p78
      %p81 = scmp.ne.s32.totalorder %s64, %s80
      %p82 = scmp.eq.s32.totalorder %s16, 0
      %p83 = por %p81, %p82
      %p84 = scmp.le.s32.totalorder 1, %s10
      %p85 = scmp.lt.s32.totalorder %s10, 3
      %p86 = pnand %p84, %p85
      %p87 = pneg %p86
      // Predicated region
      $region9: #{tpu_custom_call.1} parent=5 // pred_check
        _
      $region10: #{tpu_custom_call.1} parent=5 // pred_check_branch
        %89 = sbr.rel (%p86) target = $region12
      $region11: #{tpu_custom_call.1} parent=5 // pred_region
        %s90 = ssub.s32 %s10, 1
      $region12: #{tpu_custom_call.1} parent=5 // pred_fallthru
        _
      %p91 = scmp.lt.s32.totalorder %s10, 2
      // Predicated region
      $region13: #{tpu_custom_call.1} parent=5 // pred_check
        %p92 = pneg %p91
      $region14: #{tpu_custom_call.1} parent=5 // pred_check_branch
        %94 = sbr.rel (%p92) target = $region16
      $region15: #{tpu_custom_call.1} parent=5 // pred_region
        // Predicated region
        $region17: #{tpu_custom_call.1} parent=15 // pred_check
          %p95 = pneg %p44
        $region18: #{tpu_custom_call.1} parent=15 // pred_check_branch
          %97 = sbr.rel (%p95) target = $region20
        $region19: #{tpu_custom_call.1} parent=15 // pred_region
          %s98 = sand.u32 %s34, 1
          %s99 = scalar_lea.sflag [#allocation3], %s98
          %s100 = sand.u32 %s34, 1
          %s101 = smul.addr %s100, 8
          %s102 = scalar_lea.vmem [#allocation2], %s101
          %s103 = smul.u32 2, %s18
          %s105 = ssub.s32 128, 128
          %106 = vsyncadd %s99, %s105
          %s107 = smul.addr %s17, 2
          %s108 = sadd.s32 %s103, %s107
          %s109 = smul.addr %s108, 64
          %s110 = scalar_lea.hbm %s0, %s109
          %s112 = sshll.u32 %s102, 4
          %s113 = int_to_ptr.vmem [resolvable:$true] %s112
          %115 = dma.hbm_to_vmem [thread:$0]  %s110, 128, %s113, %s99
        $region20: #{tpu_custom_call.1} parent=15 // pred_fallthru
          _
      $region16: #{tpu_custom_call.1} parent=5 // pred_fallthru
        _
      %p116 = scmp.le.s32.totalorder 1, %s10
      %p117 = scmp.lt.s32.totalorder %s10, 3
      %p118 = pnand %p116, %p117
      %p119 = pneg %p118
      // Predicated region
      $region21: #{tpu_custom_call.1} parent=5 // pred_check
        _
      $region22: #{tpu_custom_call.1} parent=5 // pred_check_branch
        %121 = sbr.rel (%p118) target = $region24
      $region23: #{tpu_custom_call.1} parent=5 // pred_region
        %s122 = ssub.s32 %s10, 1
        %s123 = sand.u32 %s37, 1
        %s124 = scalar_lea.sflag [#allocation3], %s123
        %s125 = sand.u32 %s37, 1
        %s126 = smul.addr %s125, 8
        %s127 = scalar_lea.vmem [#allocation2], %s126
        // Predicated region
        $region25: #{tpu_custom_call.1} parent=23 // pred_check
          %p128 = pneg %p50
        $region26: #{tpu_custom_call.1} parent=23 // pred_check_branch
          %130 = sbr.rel (%p128) target = $region28
        $region27: #{tpu_custom_call.1} parent=23 // pred_region
          %131 = dma.done %s124, 128
        $region28: #{tpu_custom_call.1} parent=23 // pred_fallthru
          _
        %s132 = sand.u32 %s37, 1
        %s133 = scalar_lea.sflag [#allocation3], %s132
        %s134 = sand.u32 %s37, 1
        %s135 = smul.addr %s134, 8
        %s136 = scalar_lea.vmem [#allocation2], %s135
        %p137 = pneg %p50
        %p138 = pneg %p47
        %p139 = pneg %p76
        %p140 = pneg %p73
        %p141 = scmp.lt.s32.totalorder %s19, 1
        %s142 = scalar_select %p141, %s19, 1
        %s143 = smul.addr %s142, 4
        %s144 = scalar_lea.vmem %s1, %s143
        %s145 = smul.u32 2, %s20
        %p146 = scmp.lt.s32.totalorder %s19, 1
        %s147 = scalar_select %p146, %s19, 1
        %s148 = smul.addr %s147, 4
        %s149 = scalar_lea.vmem %s1, %s148
        %p150 = scmp.eq.s32.totalorder %s20, 0
        // Predicated region
        $region29: #{tpu_custom_call.1} parent=23 // pred_check
          %p151 = pneg %p150
        $region30: #{tpu_custom_call.1} parent=23 // pred_check_branch
          %153 = sbr.rel (%p151) target = $region32
        $region31: #{tpu_custom_call.1} parent=23 // pred_region
          %vm154 = vcmask 3072
          %155 = vst.msk [vmem:[%s149] sm:$0xf] %vm154, 0.0
        $region32: #{tpu_custom_call.1} parent=23 // pred_fallthru
          _
        %v156 = vld [vmem:[%s127] sm:$0xff]
        %v157 = vld [vmem:[%s149] sm:$0xf]
        %v159 = vcombine.high %v156, %v156
        %vm161 = vcmask 1043456
        %v162 = vsel %vm161, %v156, 0.0
        %v163 = vsel %vm161, %v159, 0.0
        %v164 = vadd.f32 %v162, %v163
        %165 = vadd.xlane.f32.xlu0 %v164
        %v166 = vpop.xlane.xlu0 %165
        %v167 = vadd.f32 %v157, %v166
        %vm168 = vcmask 3072
        %169 = vst.msk [vmem:[%s149] sm:$0xf] %vm168, %v167
        %p170 = scmp.lt.s32.totalorder %s19, 1
        %s171 = scalar_select %p170, %s19, 1
        %s172 = smul.addr %s171, 4
        %s173 = scalar_lea.vmem %s1, %s172
        // Predicated region
        $region33: #{tpu_custom_call.1} parent=23 // pred_check
          %p174 = pneg %p73
        $region34: #{tpu_custom_call.1} parent=23 // pred_check_branch
          %176 = sbr.rel (%p174) target = $region36
        $region35: #{tpu_custom_call.1} parent=23 // pred_region
          _
        $region36: #{tpu_custom_call.1} parent=23 // pred_fallthru
          _
      $region24: #{tpu_custom_call.1} parent=5 // pred_fallthru
        _
      %p177 = scmp.le.s32.totalorder 2, %s10
      // Predicated region
      $region37: #{tpu_custom_call.1} parent=5 // pred_check
        %p178 = pneg %p177
      $region38: #{tpu_custom_call.1} parent=5 // pred_check_branch
        %180 = sbr.rel (%p178) target = $region40
      $region39: #{tpu_custom_call.1} parent=5 // pred_region
        %s181 = ssub.s32 %s10, 2
        // Predicated region
        $region41: #{tpu_custom_call.1} parent=39 // pred_check
          %p182 = pneg %p79
        $region42: #{tpu_custom_call.1} parent=39 // pred_check_branch
          %184 = sbr.rel (%p182) target = $region44
        $region43: #{tpu_custom_call.1} parent=39 // pred_region
          %p185 = scmp.lt.s32.totalorder %s21, 1
          %s186 = scalar_select %p185, %s21, 1
          %s187 = smul.addr %s186, 4
          %s188 = scalar_lea.vmem %s1, %s187
        $region44: #{tpu_custom_call.1} parent=39 // pred_fallthru
          _
      $region40: #{tpu_custom_call.1} parent=5 // pred_fallthru
        _
    $region6: #{tpu_custom_call.1} parent=1 // loop_footer
      %s14 = sadd.s32 1, %s10
    $region7: #{tpu_custom_call.1} parent=1 // loop_footer_branch
      %9 = sbr.rel target = $region3
    $region8: #{tpu_custom_call.1} parent=1 // loop_exit
      _
    %189 = vsyncpa [#allocation3], 1
    %s190 = scalar_lea.sflag [#allocation3], 1
    %191 = vsyncpa %s190, 1

</llo_original>
